<compile_context>
chip_gen: v7x
topology: tpu7x:2x2x1
jax: 0.10.0
libtpu: 0.0.40
codegen_flags: <defaults>
</compile_context>

<pallas_src>
import jax
import jax.numpy as jnp
from jax.experimental import pallas as pl
from jax.experimental.pallas import tpu as pltpu


def _silu_kernel(x_ref, o_ref):
    # SiLU(x) = x * sigmoid(x); sigmoid(x) = 0.5 * tanh(0.5 * x) + 0.5.
    # Single EUP transcendental (tanh) + VPU mul/add; f32 internals, cast on store.
    x = x_ref[...].astype(jnp.float32)
    sig = 0.5 * jnp.tanh(0.5 * x) + 0.5
    o_ref[...] = (x * sig).astype(o_ref.dtype)


def _silu_jax(x):
    # Same formulation as the kernel, used only for the ragged fallback path.
    xf = x.astype(jnp.float32)
    return (xf * (0.5 * jnp.tanh(0.5 * xf) + 0.5)).astype(x.dtype)


def _silu_pallas_2d(x2d, donate=False):
    """Run the SiLU kernel over a 2D (rows, lanes) view, lanes % 128 == 0."""
    rows, lanes = x2d.shape
    itemsize = jnp.dtype(x2d.dtype).itemsize

    # Native sublane multiple for the dtype: f32 -> 8, bf16/f16 -> 16, i8/fp8 -> 32.
    # Keeps every vld/vst full-width and unmasked for packed-sublane dtypes.
    sublane = max(8, 32 // itemsize)

    # Target ~4 MiB per block: long DMAs and small per-step overhead (matters most
    # at v7x's 3.2 TB/s). (in + out) x 2 double-buffers x 4 MiB = 16 MiB VMEM,
    # inside the explicit 48 MiB limit below on every generation.
    target_block_bytes = 4 * 1024 * 1024
    tile_rows = max(target_block_bytes // (lanes * itemsize), 1)
    if tile_rows >= rows:
        tile_rows = rows                                    # full-extent block: always legal
    else:
        tile_rows = max((tile_rows // sublane) * sublane, sublane)

    n = rows * lanes
    cost = pl.CostEstimate(
        flops=4 * n,
        transcendentals=n,
        bytes_accessed=2 * n * itemsize,
    )

    return pl.pallas_call(
        _silu_kernel,
        out_shape=jax.ShapeDtypeStruct((rows, lanes), x2d.dtype),
        grid=(pl.cdiv(rows, tile_rows),),
        in_specs=[pl.BlockSpec((tile_rows, lanes), lambda i: (i, 0))],
        out_specs=pl.BlockSpec((tile_rows, lanes), lambda i: (i, 0)),
        compiler_params=pltpu.CompilerParams(
            # "parallel" lets the runtime shard the stream across TensorCores where
            # supported; on v7x, pltpu.CORE_PARALLEL can be used for explicit 2-TC split.
            dimension_semantics=("parallel",),
            vmem_limit_bytes=48 * 1024 * 1024,
        ),
        cost_estimate=cost,
        input_output_aliases=({0: 0} if donate else {}),
    )(x2d)


def silu_pallas(x, donate_input=False):
    """Apply SiLU element-wise to an array of any shape (PyTorch SiLU.forward)."""
    orig_shape = x.shape
    n = x.size
    if n == 0:
        return x

    # Pick the widest lane-dense last dim (multiple of 128) that divides the flat
    # size, so the 2D reshape is a free view and the kernel touches each byte
    # exactly twice (one read, one write).
    lanes = 0
    for cand in (4096, 2048, 1024, 512, 256, 128):
        if n % cand == 0:
            lanes = cand
            break

    if lanes:
        x2d = x.reshape(n // lanes, lanes)
        return _silu_pallas_2d(x2d, donate=donate_input).reshape(orig_shape)

    # Ragged fallback (flat size not a multiple of 128): a single fused pure-JAX
    # elementwise pass — one HBM read + one write, no concatenate/pad round trips.
    return _silu_jax(x)


if __name__ == "__main__":
    key = jax.random.PRNGKey(0)

    # 1) Main path: f32 NCHW-style input consistent with the module's (N, *) contract.
    x = jax.random.normal(key, (2, 4, 16, 16), dtype=jnp.float32)
    y = silu_pallas(x)
    jax.block_until_ready(y)
    y_ref = x * jax.nn.sigmoid(x)
    assert y.shape == x.shape and y.dtype == x.dtype
    assert jnp.max(jnp.abs(y - y_ref)) < 1e-5

    # 2) bf16 path (f32 internals, cast on store).
    xb = jax.random.normal(jax.random.PRNGKey(1), (2, 4, 16, 16), dtype=jnp.bfloat16)
    yb = silu_pallas(xb)
    jax.block_until_ready(yb)
    xb32 = xb.astype(jnp.float32)
    yb_ref = (xb32 * jax.nn.sigmoid(xb32)).astype(jnp.bfloat16)
    assert yb.shape == xb.shape and yb.dtype == xb.dtype
    assert jnp.max(jnp.abs(yb.astype(jnp.float32) - yb_ref.astype(jnp.float32))) < 5e-2

    # 3) Ragged fallback (flat size 105, not a multiple of 128).
    xr = jax.random.normal(jax.random.PRNGKey(2), (3, 5, 7), dtype=jnp.float32)
    yr = silu_pallas(xr)
    jax.block_until_ready(yr)
    yr_ref = xr * jax.nn.sigmoid(xr)
    assert yr.shape == xr.shape and yr.dtype == xr.dtype
    assert jnp.max(jnp.abs(yr - yr_ref)) < 1e-5

    print("KERNEL_OK")
</pallas_src>

<mosaic_0001>
module attributes {stable_mosaic.version = 11 : i64} {
  func.func @_silu_kernel(%arg0: i32, %arg1: memref<1x2048xf32, #tpu.memory_space<vmem>>, %arg2: memref<1x2048xf32, #tpu.memory_space<vmem>>) attributes {dimension_semantics = [#tpu.dimension_semantics<parallel>], iteration_bounds = array<i64: 1>, scalar_prefetch = 0 : i64, scratch_operands = 0 : i64, tpu.core_type = #tpu.core_type<tc>, window_params = [{transform_indices = @transform_0, window_bounds = array<i64: 1, 2048>}, {transform_indices = @transform_1, window_bounds = array<i64: 1, 2048>}]} {
    %c0 = arith.constant 0 : index
    %c0_0 = arith.constant 0 : index
    %0 = vector.load %arg1[%c0, %c0_0] : memref<1x2048xf32, #tpu.memory_space<vmem>>, vector<1x2048xf32>
    %cst = arith.constant 5.000000e-01 : f32
    %1 = vector.broadcast %cst : f32 to vector<1x2048xf32>
    %2 = arith.mulf %1, %0 : vector<1x2048xf32>
    %3 = math.tanh %2 : vector<1x2048xf32>
    %cst_1 = arith.constant 5.000000e-01 : f32
    %4 = vector.broadcast %cst_1 : f32 to vector<1x2048xf32>
    %5 = arith.mulf %4, %3 : vector<1x2048xf32>
    %cst_2 = arith.constant 5.000000e-01 : f32
    %6 = vector.broadcast %cst_2 : f32 to vector<1x2048xf32>
    %7 = arith.addf %5, %6 : vector<1x2048xf32>
    %8 = arith.mulf %0, %7 : vector<1x2048xf32>
    %c0_3 = arith.constant 0 : index
    %c0_4 = arith.constant 0 : index
    %9 = vector.load %arg2[%c0_3, %c0_4] : memref<1x2048xf32, #tpu.memory_space<vmem>>, vector<1x2048xf32>
    tpu.vector_store %arg2[%c0_3, %c0_4], %8 {strides = array<i32>} : memref<1x2048xf32, #tpu.memory_space<vmem>>, vector<1x2048xf32>,
    return
  }
  func.func @transform_0(%arg0: i32) -> (i32, i32) {
    %c0_i32 = arith.constant 0 : i32
    %c0_i32_0 = arith.constant 0 : i32
    return %arg0, %c0_i32 : i32, i32
  }
  func.func @transform_1(%arg0: i32) -> (i32, i32) {
    %c0_i32 = arith.constant 0 : i32
    %c0_i32_0 = arith.constant 0 : i32
    return %arg0, %c0_i32 : i32, i32
  }
}

</mosaic_0001>

<llo_original>
// kernel: tpu_custom_call.1
$region0: #{tpu_custom_call.1}
  #allocation0 [shape = 'u32[]', space=smem, size = 0x4, offset = 0x4, fixed_abs, tag = 'smem constant byte address 0x4 - core index']
  #allocation1 [shape = 'u32[144,128]{1,0:T(1,128)}', space=vmem, size = 0x12000, scoped, tag = 'internal scratch']
  %s0 = inlined_call_operand.hbm [shape: f32[1,2048], index: 0, kind: input, shape index: {}]
  %s1 = inlined_call_operand.hbm [shape: f32[1,2048], index: 1, kind: output, shape index: {}]
  %s2 = sld [smem:[#allocation0]]
  $region18: #{tpu_custom_call.1} parent=0
    _
  %s4 = ssub.s32 1, %s2
  %s5 = scalar_select 0, %s4, %s2
  $region1: #{tpu_custom_call.1} parent=0
    #allocation2 [shape = 'u8[8192]{0}', space=vmem, size = 0x2000, scoped, tag = 'input window, operand 0, single buffered']
    #allocation3 [shape = 's32[1]{0}', space=sflag, size = 0x4, scoped, tag = 'scoped memory for tpu_custom_call.1']
    #allocation4 [shape = 's32[1]{0}', space=sflag, size = 0x4, scoped, tag = 'scoped memory for tpu_custom_call.1']
    #allocation5 [shape = 'u8[8192]{0}', space=vmem, size = 0x2000, scoped, tag = 'output window, operand 0, single buffered']
    %6 = vsyncpa [#allocation3], 0
    %7 = vsyncpa [#allocation4], 0
    // Predicated region
    $region2: #{tpu_custom_call.1} parent=1 // pred_check
      _
    $region3: #{tpu_custom_call.1} parent=1 // pred_check_branch
      %9 = sbr.rel (0) target = $region5
    $region4: #{tpu_custom_call.1} parent=1 // pred_region
      %s11 = ssub.s32 256, 256
      %12 = vsyncadd [#allocation3], %s11
      %s14 = sshll.u32 [#allocation2], 4
      %s15 = int_to_ptr.vmem [resolvable:$true] %s14
      %17 = dma.hbm_to_vmem [thread:$0]  %s0, 256, %s15, [#allocation3]
    $region5: #{tpu_custom_call.1} parent=1 // pred_fallthru
      _
    // Predicated region
    $region6: #{tpu_custom_call.1} parent=1 // pred_check
      _
    $region7: #{tpu_custom_call.1} parent=1 // pred_check_branch
      %19 = sbr.rel (0) target = $region9
    $region8: #{tpu_custom_call.1} parent=1 // pred_region
      %20 = dma.done [#allocation3], 256
    $region9: #{tpu_custom_call.1} parent=1 // pred_fallthru
      _
    %v21 = vld [vmem:[#allocation2] sm:$0xff]
    %v22 = vld [vmem:[#allocation2 + $0x8] sm:$0xff]
    %v23 = vmul.f32 %v21, 0.5
    %v24 = vmul.f32 %v22, 0.5
    %v25 = vtanh.pop %v23
    %v26 = vtanh.pop %v24
    %v27 = vmul.f32 %v25, 0.5
    %v28 = vmul.f32 %v26, 0.5
    %v29 = vadd.f32 %v27, 0.5
    %v30 = vadd.f32 %v28, 0.5
    %v31 = vmul.f32 %v21, %v29
    %v32 = vmul.f32 %v22, %v30
    %33 = vst [vmem:[#allocation5] sm:$0xff] %v31
    %34 = vst [vmem:[#allocation5 + $0x8] sm:$0xff] %v32
    // Predicated region
    $region10: #{tpu_custom_call.1} parent=1 // pred_check
      _
    $region11: #{tpu_custom_call.1} parent=1 // pred_check_branch
      %36 = sbr.rel (0) target = $region13
    $region12: #{tpu_custom_call.1} parent=1 // pred_region
      %s38 = ssub.s32 256, 256
      %39 = vsyncadd [#allocation4], %s38
      %s41 = sshll.u32 [#allocation5], 4
      %s42 = int_to_ptr.vmem [resolvable:$true] %s41
      %44 = dma.vmem_to_hbm [thread:$0]  %s42, 256, %s1, [#allocation4]
    $region13: #{tpu_custom_call.1} parent=1 // pred_fallthru
      _
    // Predicated region
    $region14: #{tpu_custom_call.1} parent=1 // pred_check
      _
    $region15: #{tpu_custom_call.1} parent=1 // pred_check_branch
      %46 = sbr.rel (0) target = $region17
    $region16: #{tpu_custom_call.1} parent=1 // pred_region
      %47 = dma.done [#allocation4], 256
    $region17: #{tpu_custom_call.1} parent=1 // pred_fallthru
      _
    %48 = vsyncpa [#allocation3], 1
    %49 = vsyncpa [#allocation4], 1

</llo_original>
